<compile_context>
chip_gen: v7x
topology: tpu7x:2x2x1
jax: 0.10.0
libtpu: 0.0.40
codegen_flags: <defaults>
</compile_context>

<pallas_src>
import math

import jax
import jax.numpy as jnp
from jax.experimental import pallas as pl
from jax.experimental.pallas import tpu as pltpu

EMBED_DIM = 128
HEADS = 4
HEAD_DIM = EMBED_DIM // HEADS  # 32
C = EMBED_DIM


def msa_kernel(x_ref, wqkv_ref, bqkv_ref, wproj_ref, bproj_ref, o_ref):
    Bb, N, _ = x_ref.shape
    cdt = x_ref.dtype                      # compute dtype for MXU operands

    # ---- fused qkv projection over the whole (Bb*N, C) slab (fills MXU M) ----
    x2 = x_ref[...].reshape(Bb * N, C)
    qkv = jnp.dot(x2, wqkv_ref[...], preferred_element_type=jnp.float32)
    qkv = qkv + bqkv_ref[...]              # (Bb*N, 3C), f32

    # ---- 128-lane-aligned q/k/v slabs; NO per-head slicing/relayout ----------
    # (softmax scale already folded into wqkv/bqkv q-columns in the wrapper)
    q = qkv[:, 0 * C:1 * C].reshape(Bb, N, C).astype(cdt)
    k = qkv[:, 1 * C:2 * C].reshape(Bb, N, C).astype(cdt)
    v = qkv[:, 2 * C:3 * C].reshape(Bb, N, C).astype(cdt)

    # ---- per-head attention via constant channel masks -----------------------
    # Masking k (resp. v) to head h's 32 channels and contracting over the full
    # 128 lanes is mathematically identical to the per-head depth-32 matmul and
    # costs the same number of MXU passes (depth <= native MXU depth), but
    # avoids every 32-lane slice / concat / transpose.  Head-h PV output lands
    # directly in columns [h*32, (h+1)*32) so the accumulate below IS the
    # "transpose(1,2).reshape(B,N,C)" head regroup.
    lane = jax.lax.broadcasted_iota(jnp.int32, (1, 1, C), 2)

    acc = None
    for h in range(HEADS):
        hm = ((lane >= h * HEAD_DIM) & (lane < (h + 1) * HEAD_DIM)).astype(cdt)
        kh = k * hm                                            # (Bb, N, C)
        s = jnp.einsum("bnd,bmd->bnm", q, kh,
                       preferred_element_type=jnp.float32)     # (Bb, N, N) f32
        s = jnp.exp(s - jnp.max(s, axis=-1, keepdims=True))    # un-normalized probs
        denom = jnp.sum(s, axis=-1, keepdims=True)             # (Bb, N, 1) f32
        oh = jnp.einsum("bnm,bmd->bnd", s.astype(cdt), v * hm,
                        preferred_element_type=jnp.float32)    # (Bb, N, C), head-h cols only
        # normalize after PV: O(N*C) multiply instead of O(N*N); EUP reciprocal.
        oh = oh * pl.reciprocal(denom, approx=True)
        acc = oh if acc is None else acc + oh                  # f32 accumulate

    # ATTN_DROPOUT == 0.0 -> dropout is the identity (no-op).

    # ---- output projection over the whole slab -------------------------------
    attn = acc.reshape(Bb * N, C).astype(cdt)
    out = jnp.dot(attn, wproj_ref[...],
                  preferred_element_type=jnp.float32) + bproj_ref[...]
    o_ref[...] = out.reshape(Bb, N, C).astype(o_ref.dtype)


# ----------------------------------------------------------------------------
# Tiling policy (generation-aware)
# ----------------------------------------------------------------------------
def _vmem_policy():
    """Returns (vmem_limit_bytes, per-step budget, assume_dual_tensorcore)."""
    cap = None
    try:
        info = pltpu.get_tpu_info()
        cap = int(getattr(info, "vmem_capacity_bytes", 0)) or None
    except Exception:
        cap = None
    if cap is None:
        cap = 64 * 1024 * 1024          # conservative default: assume v7x-class
    if cap >= 100 * 1024 * 1024:        # v5e / v6e: 128 MiB VMEM, single TensorCore
        return 100 * 1024 * 1024, 80 * 1024 * 1024, False
    # v7x-class: 64 MiB VMEM, 2 TensorCores -> keep limit low, want grid >= 2
    return 48 * 1024 * 1024, 36 * 1024 * 1024, True


def _tile_vmem_bytes(bb, n, ci, oi):
    """Conservative per-grid-step VMEM working-set estimate (bytes)."""
    f32 = 4
    rows = bb * n
    nspad = ((n + 7) // 8) * 8           # sublane padding of N
    nlpad = ((n + 127) // 128) * 128     # lane padding of N (score columns)
    x_in = 2 * rows * C * ci             # double-buffered input block
    y_out = 2 * rows * C * oi            # double-buffered output block
    wts = 2 * (C * 3 * C + C * C) * ci + 2 * 4 * C * f32   # weights/biases (tiny)
    qkv = rows * 3 * C * f32             # f32 qkv slab
    qkvs = 3 * bb * nspad * C * ci       # q/k/v slabs in compute dtype
    masked = 2 * bb * nspad * C * ci     # k*mask, v*mask live copies
    scores = bb * nspad * nlpad * (2 * f32 + ci)   # exp(s) + slack + cdt cast (1 head live)
    accums = bb * nspad * C * f32 + 2 * rows * C * f32
    return int(1.4 * (x_in + y_out + wts + qkv + qkvs + masked + scores + accums))


def _pick_batch_tile(B, N, ci, oi, budget, dual_tc):
    divisors = sorted([d for d in range(1, B + 1) if B % d == 0], reverse=True)
    if dual_tc and B > 1:
        # guarantee >= 2 grid steps so both TensorCores get work, then maximize Bb
        candidates = [d for d in divisors if (B // d) >= 2]
    else:
        # single TensorCore: extra grid steps are pure serial overhead -> biggest Bb
        candidates = divisors
    for d in candidates:
        if _tile_vmem_bytes(d, N, ci, oi) <= budget:
            return d
    # TODO(synk): flash-style (q_tile, kv_tile) tiling with online softmax so the
    # per-step working set stays O(tq*tk) for very long sequences.
    raise ValueError(
        f"MSA kernel: (B={B}, N={N}) needs O(N^2) attention scores per batch "
        f"element and does not fit the per-step VMEM budget; flash-style "
        f"sequence tiling is not implemented.")


# ----------------------------------------------------------------------------
# Wrapper
# ----------------------------------------------------------------------------
def msa_forward(x, wqkv, bqkv, wproj, bproj, *, compute_dtype=jnp.bfloat16):
    """x: (B, N, 128); wqkv: (128, 384); bqkv: (384,); wproj: (128,128); bproj: (128,).

    Weights are stored (in, out) so the kernel computes x @ W + b (i.e. the
    transpose of the torch nn.Linear weight layout).
    """
    B, N, Cx = x.shape
    assert Cx == EMBED_DIM, f"expected embed dim {EMBED_DIM}, got {Cx}"
    out_dtype = x.dtype
    cdt = jnp.dtype(compute_dtype)

    # Fold 1/sqrt(HEAD_DIM) into the q-columns of wqkv / bqkv (one-time, free).
    scale = 1.0 / math.sqrt(HEAD_DIM)
    col_scale = jnp.concatenate(
        [jnp.full((C,), scale, jnp.float32), jnp.ones((2 * C,), jnp.float32)])
    wqkv_f = wqkv.astype(jnp.float32) * col_scale[None, :]
    bqkv_f = bqkv.astype(jnp.float32) * col_scale

    x_c = x.astype(cdt)
    wqkv_c = wqkv_f.astype(cdt)
    wproj_c = wproj.astype(cdt)
    bqkv2 = bqkv_f.reshape(1, 3 * C)                 # biases stay f32 (added to f32 acc)
    bproj2 = bproj.astype(jnp.float32).reshape(1, C)

    vmem_limit, budget, dual_tc = _vmem_policy()
    Bb = _pick_batch_tile(B, N, cdt.itemsize, jnp.dtype(out_dtype).itemsize,
                          budget, dual_tc)
    grid = (B // Bb,)

    # Actual executed flops (masked-head formulation contracts over full C).
    flops = (2 * B * N * C * 3 * C                       # qkv projection
             + 2 * 2 * B * HEADS * N * N * C             # QK^T and PV
             + 2 * B * N * C * C)                        # output projection
    bytes_accessed = (x_c.size * cdt.itemsize
                      + wqkv_c.size * cdt.itemsize + wproj_c.size * cdt.itemsize
                      + bqkv2.size * 4 + bproj2.size * 4
                      + B * N * C * jnp.dtype(out_dtype).itemsize)
    cost = pl.CostEstimate(flops=flops,
                           transcendentals=B * HEADS * N * N,
                           bytes_accessed=bytes_accessed)

    return pl.pallas_call(
        msa_kernel,
        out_shape=jax.ShapeDtypeStruct((B, N, C), out_dtype),
        grid_spec=pltpu.PrefetchScalarGridSpec(
            num_scalar_prefetch=0,
            grid=grid,
            in_specs=[
                pl.BlockSpec((Bb, N, C), lambda i: (i, 0, 0)),
                pl.BlockSpec((C, 3 * C), lambda i: (0, 0)),
                pl.BlockSpec((1, 3 * C), lambda i: (0, 0)),
                pl.BlockSpec((C, C), lambda i: (0, 0)),
                pl.BlockSpec((1, C), lambda i: (0, 0)),
            ],
            out_specs=pl.BlockSpec((Bb, N, C), lambda i: (i, 0, 0)),
        ),
        compiler_params=pltpu.CompilerParams(
            dimension_semantics=("parallel",),
            vmem_limit_bytes=vmem_limit,
        ),
        cost_estimate=cost,
    )(x_c, wqkv_c, bqkv2, wproj_c, bproj2)


# ----------------------------------------------------------------------------
# Pure-JAX reference (mirrors the PyTorch forward)
# ----------------------------------------------------------------------------
def msa_reference(x, wqkv, bqkv, wproj, bproj):
    B, N, _ = x.shape
    qkv = jnp.einsum("bnc,cd->bnd", x, wqkv) + bqkv            # (B, N, 3C)
    qkv = qkv.reshape(B, N, 3, HEADS, HEAD_DIM).transpose(2, 0, 3, 1, 4)
    q, k, v = qkv[0], qkv[1], qkv[2]                           # (B, H, N, D)
    attn = jnp.einsum("bhnd,bhmd->bhnm", q, k) / math.sqrt(HEAD_DIM)
    attn = jax.nn.softmax(attn, axis=-1)
    out = jnp.einsum("bhnm,bhmd->bhnd", attn, v)               # (B, H, N, D)
    out = out.transpose(0, 2, 1, 3).reshape(B, N, C)
    return jnp.einsum("bnc,cd->bnd", out, wproj) + bproj


if __name__ == "__main__":
    key = jax.random.PRNGKey(0)
    k_x, k_wq, k_bq, k_wp, k_bp, k_x2 = jax.random.split(key, 6)

    wqkv = jax.random.normal(k_wq, (C, 3 * C), dtype=jnp.float32) * 0.02
    bqkv = jax.random.normal(k_bq, (3 * C,), dtype=jnp.float32) * 0.02
    wproj = jax.random.normal(k_wp, (C, C), dtype=jnp.float32) * 0.02
    bproj = jax.random.normal(k_bp, (C,), dtype=jnp.float32) * 0.02

    # Small shape implied by the module: (B, N, C) = (2, 8, 128); default bf16 compute.
    x = jax.random.normal(k_x, (2, 8, C), dtype=jnp.float32)
    out = jax.block_until_ready(msa_forward(x, wqkv, bqkv, wproj, bproj))
    ref = msa_reference(x, wqkv, bqkv, wproj, bproj)
    assert out.shape == x.shape
    assert jnp.allclose(out, ref, atol=2e-2, rtol=2e-2), "mismatch vs reference (bf16, B=2,N=8)"

    # Second shape: exercises >1 grid step and the f32 compute path.
    x2 = jax.random.normal(k_x2, (8, 64, C), dtype=jnp.float32)
    out2 = jax.block_until_ready(
        msa_forward(x2, wqkv, bqkv, wproj, bproj, compute_dtype=jnp.float32))
    ref2 = msa_reference(x2, wqkv, bqkv, wproj, bproj)
    assert jnp.allclose(out2, ref2, atol=2e-3, rtol=2e-3), "mismatch vs reference (f32, B=8,N=64)"

    print("KERNEL_OK")
</pallas_src>

<mosaic_0001>
module attributes {stable_mosaic.version = 11 : i64} {
  func.func @msa_kernel(%arg0: i32, %arg1: memref<1x8x128xbf16, #tpu.memory_space<vmem>>, %arg2: memref<128x384xbf16, #tpu.memory_space<vmem>>, %arg3: memref<1x384xf32, #tpu.memory_space<vmem>>, %arg4: memref<128x128xbf16, #tpu.memory_space<vmem>>, %arg5: memref<1x128xf32, #tpu.memory_space<vmem>>, %arg6: memref<1x8x128xf32, #tpu.memory_space<vmem>>) attributes {dimension_semantics = [#tpu.dimension_semantics<parallel>], iteration_bounds = array<i64: 2>, scalar_prefetch = 0 : i64, scratch_operands = 0 : i64, tpu.core_type = #tpu.core_type<tc>, window_params = [{transform_indices = @transform_0, window_bounds = array<i64: 1, 8, 128>}, {pipeline_mode = #tpu.pipeline_mode<synchronous>, transform_indices = @transform_1, window_bounds = array<i64: 128, 384>}, {pipeline_mode = #tpu.pipeline_mode<synchronous>, transform_indices = @transform_2, window_bounds = array<i64: 1, 384>}, {pipeline_mode = #tpu.pipeline_mode<synchronous>, transform_indices = @transform_3, window_bounds = array<i64: 128, 128>}, {pipeline_mode = #tpu.pipeline_mode<synchronous>, transform_indices = @transform_4, window_bounds = array<i64: 1, 128>}, {transform_indices = @transform_5, window_bounds = array<i64: 1, 8, 128>}]} {
    %c0 = arith.constant 0 : index
    %c0_0 = arith.constant 0 : index
    %c0_1 = arith.constant 0 : index
    %0 = vector.load %arg1[%c0, %c0_0, %c0_1] : memref<1x8x128xbf16, #tpu.memory_space<vmem>>, vector<1x8x128xbf16>
    %1 = vector.shape_cast %0 : vector<1x8x128xbf16> to vector<8x128xbf16>
    %c0_2 = arith.constant 0 : index
    %c0_3 = arith.constant 0 : index
    %2 = vector.load %arg2[%c0_2, %c0_3] : memref<128x384xbf16, #tpu.memory_space<vmem>>, vector<128x384xbf16>
    %cst = arith.constant dense<0.000000e+00> : vector<8x384xf32>
    %3 = tpu.matmul %1, %2, %cst {dimension_numbers = #tpu.dot_dimension_numbers<[1], [0], [0], [1], [0, 0, 1, 1], [], []>} : vector<8x128xbf16>, vector<128x384xbf16>, vector<8x384xf32> -> vector<8x384xf32>
    %c0_4 = arith.constant 0 : index
    %c0_5 = arith.constant 0 : index
    %4 = vector.load %arg3[%c0_4, %c0_5] : memref<1x384xf32, #tpu.memory_space<vmem>>, vector<1x384xf32>
    %5 = vector.broadcast %4 : vector<1x384xf32> to vector<8x384xf32>
    %6 = arith.addf %3, %5 : vector<8x384xf32>
    %7 = vector.extract_strided_slice %6 {offsets = [0, 0], sizes = [8, 128], strides = [1, 1]} : vector<8x384xf32> to vector<8x128xf32>
    %8 = vector.shape_cast %7 : vector<8x128xf32> to vector<1x8x128xf32>
    %9 = arith.truncf %8 : vector<1x8x128xf32> to vector<1x8x128xbf16>
    %10 = vector.extract_strided_slice %6 {offsets = [0, 128], sizes = [8, 128], strides = [1, 1]} : vector<8x384xf32> to vector<8x128xf32>
    %11 = vector.shape_cast %10 : vector<8x128xf32> to vector<1x8x128xf32>
    %12 = arith.truncf %11 : vector<1x8x128xf32> to vector<1x8x128xbf16>
    %13 = vector.extract_strided_slice %6 {offsets = [0, 256], sizes = [8, 128], strides = [1, 1]} : vector<8x384xf32> to vector<8x128xf32>
    %14 = vector.shape_cast %13 : vector<8x128xf32> to vector<1x8x128xf32>
    %15 = arith.truncf %14 : vector<1x8x128xf32> to vector<1x8x128xbf16>
    %16 = tpu.iota {dimensions = array<i32: 2>} : vector<1x1x128xi32>
    %c0_i32 = arith.constant 0 : i32
    %17 = vector.broadcast %c0_i32 : i32 to vector<1x1x128xi32>
    %18 = arith.cmpi sge, %16, %17 : vector<1x1x128xi32>
    %c32_i32 = arith.constant 32 : i32
    %19 = vector.broadcast %c32_i32 : i32 to vector<1x1x128xi32>
    %20 = arith.cmpi slt, %16, %19 : vector<1x1x128xi32>
    %21 = arith.andi %18, %20 : vector<1x1x128xi1>
    %22 = arith.extui %21 : vector<1x1x128xi1> to vector<1x1x128xi32>
    %23 = arith.sitofp %22 : vector<1x1x128xi32> to vector<1x1x128xf32>
    %24 = arith.truncf %23 : vector<1x1x128xf32> to vector<1x1x128xbf16>
    %25 = vector.broadcast %24 : vector<1x1x128xbf16> to vector<1x8x128xbf16>
    %26 = arith.mulf %12, %25 : vector<1x8x128xbf16>
    "tpu.trace_start"() <{level = 10 : i32, message = "bnd,bmd->bnm"}> : () -> ()
    %cst_6 = arith.constant dense<0.000000e+00> : vector<1x8x8xf32>
    %27 = tpu.matmul %9, %26, %cst_6 {dimension_numbers = #tpu.dot_dimension_numbers<[2], [2], [1], [1], [0, 0, 0, 1, 1, 1], [0], [0]>} : vector<1x8x128xbf16>, vector<1x8x128xbf16>, vector<1x8x8xf32> -> vector<1x8x8xf32>
    "tpu.trace_stop"() : () -> ()
    %cst_7 = arith.constant dense<0xFF800000> : vector<1x8xf32>
    %28 = vector.multi_reduction <maximumf>, %27, %cst_7 [2] : vector<1x8x8xf32> to vector<1x8xf32>
    %29 = vector.shape_cast %28 : vector<1x8xf32> to vector<1x8x1xf32>
    %30 = vector.broadcast %29 : vector<1x8x1xf32> to vector<1x8x8xf32>
    %31 = arith.subf %27, %30 : vector<1x8x8xf32>
    %32 = math.exp %31 : vector<1x8x8xf32>
    %cst_8 = arith.constant dense<0.000000e+00> : vector<1x8xf32>
    %33 = vector.multi_reduction <add>, %32, %cst_8 [2] : vector<1x8x8xf32> to vector<1x8xf32>
    %34 = vector.shape_cast %33 : vector<1x8xf32> to vector<1x8x1xf32>
    %35 = arith.truncf %32 : vector<1x8x8xf32> to vector<1x8x8xbf16>
    %36 = vector.broadcast %24 : vector<1x1x128xbf16> to vector<1x8x128xbf16>
    %37 = arith.mulf %15, %36 : vector<1x8x128xbf16>
    "tpu.trace_start"() <{level = 10 : i32, message = "bnm,bmd->bnd"}> : () -> ()
    %cst_9 = arith.constant dense<0.000000e+00> : vector<1x8x128xf32>
    %38 = tpu.matmul %35, %37, %cst_9 {dimension_numbers = #tpu.dot_dimension_numbers<[2], [1], [1], [2], [0, 0, 0, 1, 1, 2], [0], [0]>} : vector<1x8x8xbf16>, vector<1x8x128xbf16>, vector<1x8x128xf32> -> vector<1x8x128xf32>
    "tpu.trace_stop"() : () -> ()
    %39 = tpu.reciprocal %34 {approx = true} : vector<1x8x1xf32> -> vector<1x8x1xf32>
    %40 = vector.broadcast %39 : vector<1x8x1xf32> to vector<1x8x128xf32>
    %41 = arith.mulf %38, %40 : vector<1x8x128xf32>
    %c32_i32_10 = arith.constant 32 : i32
    %42 = vector.broadcast %c32_i32_10 : i32 to vector<1x1x128xi32>
    %43 = arith.cmpi sge, %16, %42 : vector<1x1x128xi32>
    %c64_i32 = arith.constant 64 : i32
    %44 = vector.broadcast %c64_i32 : i32 to vector<1x1x128xi32>
    %45 = arith.cmpi slt, %16, %44 : vector<1x1x128xi32>
    %46 = arith.andi %43, %45 : vector<1x1x128xi1>
    %47 = arith.extui %46 : vector<1x1x128xi1> to vector<1x1x128xi32>
    %48 = arith.sitofp %47 : vector<1x1x128xi32> to vector<1x1x128xf32>
    %49 = arith.truncf %48 : vector<1x1x128xf32> to vector<1x1x128xbf16>
    %50 = vector.broadcast %49 : vector<1x1x128xbf16> to vector<1x8x128xbf16>
    %51 = arith.mulf %12, %50 : vector<1x8x128xbf16>
    "tpu.trace_start"() <{level = 10 : i32, message = "bnd,bmd->bnm"}> : () -> ()
    %cst_11 = arith.constant dense<0.000000e+00> : vector<1x8x8xf32>
    %52 = tpu.matmul %9, %51, %cst_11 {dimension_numbers = #tpu.dot_dimension_numbers<[2], [2], [1], [1], [0, 0, 0, 1, 1, 1], [0], [0]>} : vector<1x8x128xbf16>, vector<1x8x128xbf16>, vector<1x8x8xf32> -> vector<1x8x8xf32>
    "tpu.trace_stop"() : () -> ()
    %cst_12 = arith.constant dense<0xFF800000> : vector<1x8xf32>
    %53 = vector.multi_reduction <maximumf>, %52, %cst_12 [2] : vector<1x8x8xf32> to vector<1x8xf32>
    %54 = vector.shape_cast %53 : vector<1x8xf32> to vector<1x8x1xf32>
    %55 = vector.broadcast %54 : vector<1x8x1xf32> to vector<1x8x8xf32>
    %56 = arith.subf %52, %55 : vector<1x8x8xf32>
    %57 = math.exp %56 : vector<1x8x8xf32>
    %cst_13 = arith.constant dense<0.000000e+00> : vector<1x8xf32>
    %58 = vector.multi_reduction <add>, %57, %cst_13 [2] : vector<1x8x8xf32> to vector<1x8xf32>
    %59 = vector.shape_cast %58 : vector<1x8xf32> to vector<1x8x1xf32>
    %60 = arith.truncf %57 : vector<1x8x8xf32> to vector<1x8x8xbf16>
    %61 = vector.broadcast %49 : vector<1x1x128xbf16> to vector<1x8x128xbf16>
    %62 = arith.mulf %15, %61 : vector<1x8x128xbf16>
    "tpu.trace_start"() <{level = 10 : i32, message = "bnm,bmd->bnd"}> : () -> ()
    %cst_14 = arith.constant dense<0.000000e+00> : vector<1x8x128xf32>
    %63 = tpu.matmul %60, %62, %cst_14 {dimension_numbers = #tpu.dot_dimension_numbers<[2], [1], [1], [2], [0, 0, 0, 1, 1, 2], [0], [0]>} : vector<1x8x8xbf16>, vector<1x8x128xbf16>, vector<1x8x128xf32> -> vector<1x8x128xf32>
    "tpu.trace_stop"() : () -> ()
    %64 = tpu.reciprocal %59 {approx = true} : vector<1x8x1xf32> -> vector<1x8x1xf32>
    %65 = vector.broadcast %64 : vector<1x8x1xf32> to vector<1x8x128xf32>
    %66 = arith.mulf %63, %65 : vector<1x8x128xf32>
    %67 = arith.addf %41, %66 : vector<1x8x128xf32>
    %c64_i32_15 = arith.constant 64 : i32
    %68 = vector.broadcast %c64_i32_15 : i32 to vector<1x1x128xi32>
    %69 = arith.cmpi sge, %16, %68 : vector<1x1x128xi32>
    %c96_i32 = arith.constant 96 : i32
    %70 = vector.broadcast %c96_i32 : i32 to vector<1x1x128xi32>
    %71 = arith.cmpi slt, %16, %70 : vector<1x1x128xi32>
    %72 = arith.andi %69, %71 : vector<1x1x128xi1>
    %73 = arith.extui %72 : vector<1x1x128xi1> to vector<1x1x128xi32>
    %74 = arith.sitofp %73 : vector<1x1x128xi32> to vector<1x1x128xf32>
    %75 = arith.truncf %74 : vector<1x1x128xf32> to vector<1x1x128xbf16>
    %76 = vector.broadcast %75 : vector<1x1x128xbf16> to vector<1x8x128xbf16>
    %77 = arith.mulf %12, %76 : vector<1x8x128xbf16>
    "tpu.trace_start"() <{level = 10 : i32, message = "bnd,bmd->bnm"}> : () -> ()
    %cst_16 = arith.constant dense<0.000000e+00> : vector<1x8x8xf32>
    %78 = tpu.matmul %9, %77, %cst_16 {dimension_numbers = #tpu.dot_dimension_numbers<[2], [2], [1], [1], [0, 0, 0, 1, 1, 1], [0], [0]>} : vector<1x8x128xbf16>, vector<1x8x128xbf16>, vector<1x8x8xf32> -> vector<1x8x8xf32>
    "tpu.trace_stop"() : () -> ()
    %cst_17 = arith.constant dense<0xFF800000> : vector<1x8xf32>
    %79 = vector.multi_reduction <maximumf>, %78, %cst_17 [2] : vector<1x8x8xf32> to vector<1x8xf32>
    %80 = vector.shape_cast %79 : vector<1x8xf32> to vector<1x8x1xf32>
    %81 = vector.broadcast %80 : vector<1x8x1xf32> to vector<1x8x8xf32>
    %82 = arith.subf %78, %81 : vector<1x8x8xf32>
    %83 = math.exp %82 : vector<1x8x8xf32>
    %cst_18 = arith.constant dense<0.000000e+00> : vector<1x8xf32>
    %84 = vector.multi_reduction <add>, %83, %cst_18 [2] : vector<1x8x8xf32> to vector<1x8xf32>
    %85 = vector.shape_cast %84 : vector<1x8xf32> to vector<1x8x1xf32>
    %86 = arith.truncf %83 : vector<1x8x8xf32> to vector<1x8x8xbf16>
    %87 = vector.broadcast %75 : vector<1x1x128xbf16> to vector<1x8x128xbf16>
    %88 = arith.mulf %15, %87 : vector<1x8x128xbf16>
    "tpu.trace_start"() <{level = 10 : i32, message = "bnm,bmd->bnd"}> : () -> ()
    %cst_19 = arith.constant dense<0.000000e+00> : vector<1x8x128xf32>
    %89 = tpu.matmul %86, %88, %cst_19 {dimension_numbers = #tpu.dot_dimension_numbers<[2], [1], [1], [2], [0, 0, 0, 1, 1, 2], [0], [0]>} : vector<1x8x8xbf16>, vector<1x8x128xbf16>, vector<1x8x128xf32> -> vector<1x8x128xf32>
    "tpu.trace_stop"() : () -> ()
    %90 = tpu.reciprocal %85 {approx = true} : vector<1x8x1xf32> -> vector<1x8x1xf32>
    %91 = vector.broadcast %90 : vector<1x8x1xf32> to vector<1x8x128xf32>
    %92 = arith.mulf %89, %91 : vector<1x8x128xf32>
    %93 = arith.addf %67, %92 : vector<1x8x128xf32>
    %c96_i32_20 = arith.constant 96 : i32
    %94 = vector.broadcast %c96_i32_20 : i32 to vector<1x1x128xi32>
    %95 = arith.cmpi sge, %16, %94 : vector<1x1x128xi32>
    %c128_i32 = arith.constant 128 : i32
    %96 = vector.broadcast %c128_i32 : i32 to vector<1x1x128xi32>
    %97 = arith.cmpi slt, %16, %96 : vector<1x1x128xi32>
    %98 = arith.andi %95, %97 : vector<1x1x128xi1>
    %99 = arith.extui %98 : vector<1x1x128xi1> to vector<1x1x128xi32>
    %100 = arith.sitofp %99 : vector<1x1x128xi32> to vector<1x1x128xf32>
    %101 = arith.truncf %100 : vector<1x1x128xf32> to vector<1x1x128xbf16>
    %102 = vector.broadcast %101 : vector<1x1x128xbf16> to vector<1x8x128xbf16>
    %103 = arith.mulf %12, %102 : vector<1x8x128xbf16>
    "tpu.trace_start"() <{level = 10 : i32, message = "bnd,bmd->bnm"}> : () -> ()
    %cst_21 = arith.constant dense<0.000000e+00> : vector<1x8x8xf32>
    %104 = tpu.matmul %9, %103, %cst_21 {dimension_numbers = #tpu.dot_dimension_numbers<[2], [2], [1], [1], [0, 0, 0, 1, 1, 1], [0], [0]>} : vector<1x8x128xbf16>, vector<1x8x128xbf16>, vector<1x8x8xf32> -> vector<1x8x8xf32>
    "tpu.trace_stop"() : () -> ()
    %cst_22 = arith.constant dense<0xFF800000> : vector<1x8xf32>
    %105 = vector.multi_reduction <maximumf>, %104, %cst_22 [2] : vector<1x8x8xf32> to vector<1x8xf32>
    %106 = vector.shape_cast %105 : vector<1x8xf32> to vector<1x8x1xf32>
    %107 = vector.broadcast %106 : vector<1x8x1xf32> to vector<1x8x8xf32>
    %108 = arith.subf %104, %107 : vector<1x8x8xf32>
    %109 = math.exp %108 : vector<1x8x8xf32>
    %cst_23 = arith.constant dense<0.000000e+00> : vector<1x8xf32>
    %110 = vector.multi_reduction <add>, %109, %cst_23 [2] : vector<1x8x8xf32> to vector<1x8xf32>
    %111 = vector.shape_cast %110 : vector<1x8xf32> to vector<1x8x1xf32>
    %112 = arith.truncf %109 : vector<1x8x8xf32> to vector<1x8x8xbf16>
    %113 = vector.broadcast %101 : vector<1x1x128xbf16> to vector<1x8x128xbf16>
    %114 = arith.mulf %15, %113 : vector<1x8x128xbf16>
    "tpu.trace_start"() <{level = 10 : i32, message = "bnm,bmd->bnd"}> : () -> ()
    %cst_24 = arith.constant dense<0.000000e+00> : vector<1x8x128xf32>
    %115 = tpu.matmul %112, %114, %cst_24 {dimension_numbers = #tpu.dot_dimension_numbers<[2], [1], [1], [2], [0, 0, 0, 1, 1, 2], [0], [0]>} : vector<1x8x8xbf16>, vector<1x8x128xbf16>, vector<1x8x128xf32> -> vector<1x8x128xf32>
    "tpu.trace_stop"() : () -> ()
    %116 = tpu.reciprocal %111 {approx = true} : vector<1x8x1xf32> -> vector<1x8x1xf32>
    %117 = vector.broadcast %116 : vector<1x8x1xf32> to vector<1x8x128xf32>
    %118 = arith.mulf %115, %117 : vector<1x8x128xf32>
    %119 = arith.addf %93, %118 : vector<1x8x128xf32>
    %120 = vector.shape_cast %119 : vector<1x8x128xf32> to vector<8x128xf32>
    %121 = arith.truncf %120 : vector<8x128xf32> to vector<8x128xbf16>
    %c0_25 = arith.constant 0 : index
    %c0_26 = arith.constant 0 : index
    %122 = vector.load %arg4[%c0_25, %c0_26] : memref<128x128xbf16, #tpu.memory_space<vmem>>, vector<128x128xbf16>
    %cst_27 = arith.constant dense<0.000000e+00> : vector<8x128xf32>
    %123 = tpu.matmul %121, %122, %cst_27 {dimension_numbers = #tpu.dot_dimension_numbers<[1], [0], [0], [1], [0, 0, 1, 1], [], []>} : vector<8x128xbf16>, vector<128x128xbf16>, vector<8x128xf32> -> vector<8x128xf32>
    %c0_28 = arith.constant 0 : index
    %c0_29 = arith.constant 0 : index
    %124 = vector.load %arg5[%c0_28, %c0_29] : memref<1x128xf32, #tpu.memory_space<vmem>>, vector<1x128xf32>
    %125 = vector.broadcast %124 : vector<1x128xf32> to vector<8x128xf32>
    %126 = arith.addf %123, %125 : vector<8x128xf32>
    %127 = vector.shape_cast %126 : vector<8x128xf32> to vector<1x8x128xf32>
    %c0_30 = arith.constant 0 : index
    %c0_31 = arith.constant 0 : index
    %c0_32 = arith.constant 0 : index
    %128 = vector.load %arg6[%c0_30, %c0_31, %c0_32] : memref<1x8x128xf32, #tpu.memory_space<vmem>>, vector<1x8x128xf32>
    tpu.vector_store %arg6[%c0_30, %c0_31, %c0_32], %127 {strides = array<i32>} : memref<1x8x128xf32, #tpu.memory_space<vmem>>, vector<1x8x128xf32>,
    return
  }
  func.func @transform_0(%arg0: i32) -> (i32, i32, i32) {
    %c0_i32 = arith.constant 0 : i32
    %c0_i32_0 = arith.constant 0 : i32
    %c0_i32_1 = arith.constant 0 : i32
    return %arg0, %c0_i32, %c0_i32_0 : i32, i32, i32
  }
  func.func @transform_1(%arg0: i32) -> (i32, i32) {
    %c0_i32 = arith.constant 0 : i32
    %c0_i32_0 = arith.constant 0 : i32
    %c0_i32_1 = arith.constant 0 : i32
    return %c0_i32, %c0_i32_0 : i32, i32
  }
  func.func @transform_2(%arg0: i32) -> (i32, i32) {
    %c0_i32 = arith.constant 0 : i32
    %c0_i32_0 = arith.constant 0 : i32
    %c0_i32_1 = arith.constant 0 : i32
    return %c0_i32, %c0_i32_0 : i32, i32
  }
  func.func @transform_3(%arg0: i32) -> (i32, i32) {
    %c0_i32 = arith.constant 0 : i32
    %c0_i32_0 = arith.constant 0 : i32
    %c0_i32_1 = arith.constant 0 : i32
    return %c0_i32, %c0_i32_0 : i32, i32
  }
  func.func @transform_4(%arg0: i32) -> (i32, i32) {
    %c0_i32 = arith.constant 0 : i32
    %c0_i32_0 = arith.constant 0 : i32
    %c0_i32_1 = arith.constant 0 : i32
    return %c0_i32, %c0_i32_0 : i32, i32
  }
  func.func @transform_5(%arg0: i32) -> (i32, i32, i32) {
    %c0_i32 = arith.constant 0 : i32
    %c0_i32_0 = arith.constant 0 : i32
    %c0_i32_1 = arith.constant 0 : i32
    return %arg0, %c0_i32, %c0_i32_0 : i32, i32, i32
  }
}

</mosaic_0001>

<llo_original>
// kernel: tpu_custom_call.1
$region0: #{tpu_custom_call.1}
  #allocation0 [shape = 'u32[]', space=smem, size = 0x4, offset = 0x4, fixed_abs, tag = 'smem constant byte address 0x4 - core index']
  #allocation1 [shape = 'u32[144,128]{1,0:T(1,128)}', space=vmem, size = 0x12000, scoped, tag = 'internal scratch']
  %s0 = inlined_call_operand.hbm [shape: bf16[2,8,128], index: 0, kind: input, shape index: {}]
  %s1 = inlined_call_operand.hbm [shape: bf16[128,384], index: 1, kind: input, shape index: {}]
  %s2 = inlined_call_operand.vmem [shape: f32[1,384], index: 2, kind: input, shape index: {}]
  %s3 = inlined_call_operand.hbm [shape: bf16[128,128], index: 3, kind: input, shape index: {}]
  %s4 = inlined_call_operand.vmem [shape: f32[1,128], index: 4, kind: input, shape index: {}]
  %s5 = inlined_call_operand.hbm [shape: f32[2,8,128], index: 5, kind: output, shape index: {}]
  %s6 = sld [smem:[#allocation0]]
  $region65: #{tpu_custom_call.1} parent=0
    _
  %s8 = ssub.s32 1, %s6
  %s9 = scalar_select 0, %s8, %s6
  $region1: #{tpu_custom_call.1} parent=0
    #allocation2 [shape = 'u8[4096]{0}', space=vmem, size = 0x1000, scoped, tag = 'input window, operand 0']
    #allocation3 [shape = 's32[2]{0}', space=sflag, size = 0x8, scoped, tag = 'scoped memory for tpu_custom_call.1']
    #allocation4 [shape = 's32[2]{0}', space=sflag, size = 0x8, scoped, tag = 'scoped memory for tpu_custom_call.1']
    #allocation5 [shape = 'u8[98304]{0}', space=vmem, size = 0x18000, scoped, tag = 'input window, operand 1, single buffered']
    #allocation6 [shape = 's32[1]{0}', space=sflag, size = 0x4, scoped, tag = 'scoped memory for tpu_custom_call.1']
    #allocation7 [shape = 'u8[32768]{0}', space=vmem, size = 0x8000, scoped, tag = 'input window, operand 3, single buffered']
    #allocation8 [shape = 'u8[8192]{0}', space=vmem, size = 0x2000, scoped, tag = 'output window, operand 0']
    %10 = vsyncpa [#allocation3], 0
    %s11 = scalar_lea.sflag [#allocation3], 1
    %12 = vsyncpa %s11, 0
    %13 = vsyncpa [#allocation6], 0
    %14 = vsyncpa [#allocation4], 0
    %s15 = scalar_lea.sflag [#allocation4], 1
    %16 = vsyncpa %s15, 0
    loop: start=0, step=1, limit=4
    $region2: #{tpu_custom_call.1} parent=1 // loop_pre_header
      _
    $region3: #{tpu_custom_call.1} parent=1 // loop_header
      %s18 = sphi 0, %s22
      %p19 = scmp.ge.s32.totalorder %s18, 4
      %s28 = sphi 0, %s30
      %s31 = sphi 0, %s28
      %s32 = sphi 0, %s31
      %s48 = sphi 0, %s32
      %s52 = sphi 0, %s52
      %s54 = sphi 0, %s52
      %s55 = sphi 0, %s54
      %s69 = sphi 0, %s55
      %s73 = sphi 0, %s73
      %s75 = sphi 0, %s73
      %s76 = sphi 0, %s75
      %s90 = sphi 0, %s76
      %s94 = sphi 0, %s94
      %s96 = sphi 0, %s94
      %s97 = sphi 0, %s96
      %s111 = sphi 0, %s97
      %s115 = sphi 0, %s115
      %s117 = sphi 0, %s115
      %s118 = sphi 0, %s117
      %s132 = sphi 0, %s118
      %s138 = sphi 0, %s140
      %s141 = sphi 0, %s138
      %s142 = sphi 0, %s141
      %s158 = sphi 0, %s142
    $region4: #{tpu_custom_call.1} parent=1 // loop_header_branch
      %21 = sbr.rel (%p19) target = $region8
    $region5: #{tpu_custom_call.1} parent=1 // loop_body
      %s23 = ssub.s32 %s18, 1
      %s24 = ssub.s32 %s18, 2
      %s25 = sadd.s32 %s18, 1
      %s26 = ssub.s32 %s18, %s25
      %p27 = scmp.eq.s32.totalorder %s26, 0
      %s29 = sadd.s32 %s28, 1
      %s30 = scalar_select %p27, %s28, %s29
      %p33 = pneg %p27
      %p34 = scmp.eq.s32.totalorder %s18, 1
      %p35 = por %p33, %p34
      %p36 = scmp.ne.s32.totalorder %s28, %s31
      %p37 = scmp.eq.s32.totalorder %s18, 0
      %p38 = por %p36, %p37
      %p39 = scmp.ne.s32.totalorder %s28, %s31
      %p40 = scmp.eq.s32.totalorder %s23, 1
      %p41 = por %p39, %p40
      %p42 = scmp.ne.s32.totalorder %s31, %s32
      %p43 = scmp.eq.s32.totalorder %s23, 0
      %p44 = por %p42, %p43
      %p45 = scmp.ne.s32.totalorder %s31, %s32
      %p46 = scmp.eq.s32.totalorder %s24, 1
      %p47 = por %p45, %p46
      %p49 = scmp.ne.s32.totalorder %s32, %s48
      %p50 = scmp.eq.s32.totalorder %s24, 0
      %p51 = por %p49, %p50
      %s53 = sadd.s32 %s52, 1
      %p56 = scmp.eq.s32.totalorder %s18, 1
      %p57 = scmp.ne.s32.totalorder %s52, %s54
      %p58 = scmp.eq.s32.totalorder %s18, 0
      %p59 = por %p57, %p58
      %p60 = scmp.ne.s32.totalorder %s52, %s54
      %p61 = scmp.eq.s32.totalorder %s23, 1
      %p62 = por %p60, %p61
      %p63 = scmp.ne.s32.totalorder %s54, %s55
      %p64 = scmp.eq.s32.totalorder %s23, 0
      %p65 = por %p63, %p64
      %p66 = scmp.ne.s32.totalorder %s54, %s55
      %p67 = scmp.eq.s32.totalorder %s24, 1
      %p68 = por %p66, %p67
      %p70 = scmp.ne.s32.totalorder %s55, %s69
      %p71 = scmp.eq.s32.totalorder %s24, 0
      %p72 = por %p70, %p71
      %s74 = sadd.s32 %s73, 1
      %p77 = scmp.eq.s32.totalorder %s18, 1
      %p78 = scmp.ne.s32.totalorder %s73, %s75
      %p79 = scmp.eq.s32.totalorder %s18, 0
      %p80 = por %p78, %p79
      %p81 = scmp.ne.s32.totalorder %s73, %s75
      %p82 = scmp.eq.s32.totalorder %s23, 1
      %p83 = por %p81, %p82
      %p84 = scmp.ne.s32.totalorder %s75, %s76
      %p85 = scmp.eq.s32.totalorder %s23, 0
      %p86 = por %p84, %p85
      %p87 = scmp.ne.s32.totalorder %s75, %s76
      %p88 = scmp.eq.s32.totalorder %s24, 1
      %p89 = por %p87, %p88
      %p91 = scmp.ne.s32.totalorder %s76, %s90
      %p92 = scmp.eq.s32.totalorder %s24, 0
      %p93 = por %p91, %p92
      %s95 = sadd.s32 %s94, 1
      %p98 = scmp.eq.s32.totalorder %s18, 1
      %p99 = scmp.ne.s32.totalorder %s94, %s96
      %p100 = scmp.eq.s32.totalorder %s18, 0
      %p101 = por %p99, %p100
      %p102 = scmp.ne.s32.totalorder %s94, %s96
      %p103 = scmp.eq.s32.totalorder %s23, 1
      %p104 = por %p102, %p103
      %p105 = scmp.ne.s32.totalorder %s96, %s97
      %p106 = scmp.eq.s32.totalorder %s23, 0
      %p107 = por %p105, %p106
      %p108 = scmp.ne.s32.totalorder %s96, %s97
      %p109 = scmp.eq.s32.totalorder %s24, 1
      %p110 = por %p108, %p109
      %p112 = scmp.ne.s32.totalorder %s97, %s111
      %p113 = scmp.eq.s32.totalorder %s24, 0
      %p114 = por %p112, %p113
      %s116 = sadd.s32 %s115, 1
      %p119 = scmp.eq.s32.totalorder %s18, 1
      %p120 = scmp.ne.s32.totalorder %s115, %s117
      %p121 = scmp.eq.s32.totalorder %s18, 0
      %p122 = por %p120, %p121
      %p123 = scmp.ne.s32.totalorder %s115, %s117
      %p124 = scmp.eq.s32.totalorder %s23, 1
      %p125 = por %p123, %p124
      %p126 = scmp.ne.s32.totalorder %s117, %s118
      %p127 = scmp.eq.s32.totalorder %s23, 0
      %p128 = por %p126, %p127
      %p129 = scmp.ne.s32.totalorder %s117, %s118
      %p130 = scmp.eq.s32.totalorder %s24, 1
      %p131 = por %p129, %p130
      %p133 = scmp.ne.s32.totalorder %s118, %s132
      %p134 = scmp.eq.s32.totalorder %s24, 0
      %p135 = por %p133, %p134
      %s136 = ssub.s32 %s18, %s25
      %p137 = scmp.eq.s32.totalorder %s136, 0
      %s139 = sadd.s32 %s138, 1
      %s140 = scalar_select %p137, %s138, %s139
      %p143 = pneg %p137
      %p144 = scmp.eq.s32.totalorder %s18, 1
      %p145 = por %p143, %p144
      %p146 = scmp.ne.s32.totalorder %s138, %s141
      %p147 = scmp.eq.s32.totalorder %s18, 0
      %p148 = por %p146, %p147
      %p149 = scmp.ne.s32.totalorder %s138, %s141
      %p150 = scmp.eq.s32.totalorder %s23, 1
      %p151 = por %p149, %p150
      %p152 = scmp.ne.s32.totalorder %s141, %s142
      %p153 = scmp.eq.s32.totalorder %s23, 0
      %p154 = por %p152, %p153
      %p155 = scmp.ne.s32.totalorder %s141, %s142
      %p156 = scmp.eq.s32.totalorder %s24, 1
      %p157 = por %p155, %p156
      %p159 = scmp.ne.s32.totalorder %s142, %s158
      %p160 = scmp.eq.s32.totalorder %s24, 0
      %p161 = por %p159, %p160
      %p162 = scmp.le.s32.totalorder 1, %s18
      %p163 = scmp.lt.s32.totalorder %s18, 3
      %p164 = pnand %p162, %p163
      %p165 = pneg %p164
      // Predicated region
      $region9: #{tpu_custom_call.1} parent=5 // pred_check
        _
      $region10: #{tpu_custom_call.1} parent=5 // pred_check_branch
        %167 = sbr.rel (%p164) target = $region12
      $region11: #{tpu_custom_call.1} parent=5 // pred_region
        %s168 = ssub.s32 %s18, 1
        // Predicated region
        $region13: #{tpu_custom_call.1} parent=11 // pred_check
          %p169 = pneg %p65
        $region14: #{tpu_custom_call.1} parent=11 // pred_check_branch
          %171 = sbr.rel (%p169) target = $region16
        $region15: #{tpu_custom_call.1} parent=11 // pred_region
          %s173 = ssub.s32 3072, 3072
          %174 = vsyncadd [#allocation6], %s173
          %s175 = sshll.u32 [#allocation5], 4
          %s176 = int_to_ptr.vmem [resolvable:$true] %s175
          %181 = dma.hbm_to_vmem [thread:$0]  %s1, 3072, %s176, [#allocation6], 192, 192, 12
        $region16: #{tpu_custom_call.1} parent=11 // pred_fallthru
          _
        // Predicated region
        $region17: #{tpu_custom_call.1} parent=11 // pred_check
          %p182 = pneg %p86
        $region18: #{tpu_custom_call.1} parent=11 // pred_check_branch
          %184 = sbr.rel (%p182) target = $region20
        $region19: #{tpu_custom_call.1} parent=11 // pred_region
          _
        $region20: #{tpu_custom_call.1} parent=11 // pred_fallthru
          _
        // Predicated region
        $region21: #{tpu_custom_call.1} parent=11 // pred_check
          %p185 = pneg %p107
        $region22: #{tpu_custom_call.1} parent=11 // pred_check_branch
          %187 = sbr.rel (%p185) target = $region24
        $region23: #{tpu_custom_call.1} parent=11 // pred_region
          %s189 = ssub.s32 1024, 1024
          %190 = vsyncadd [#allocation6], %s189
          %s191 = sshll.u32 [#allocation7], 4
          %s192 = int_to_ptr.vmem [resolvable:$true] %s191
          %197 = dma.hbm_to_vmem [thread:$0]  %s3, 1024, %s192, [#allocation6], 64, 64, 4
        $region24: #{tpu_custom_call.1} parent=11 // pred_fallthru
          _
        // Predicated region
        $region25: #{tpu_custom_call.1} parent=11 // pred_check
          %p198 = pneg %p128
        $region26: #{tpu_custom_call.1} parent=11 // pred_check_branch
          %200 = sbr.rel (%p198) target = $region28
        $region27: #{tpu_custom_call.1} parent=11 // pred_region
          _
        $region28: #{tpu_custom_call.1} parent=11 // pred_fallthru
          _
      $region12: #{tpu_custom_call.1} parent=5 // pred_fallthru
        _
      %p201 = scmp.lt.s32.totalorder %s18, 2
      // Predicated region
      $region29: #{tpu_custom_call.1} parent=5 // pred_check
        %p202 = pneg %p201
      $region30: #{tpu_custom_call.1} parent=5 // pred_check_branch
        %204 = sbr.rel (%p202) target = $region32
      $region31: #{tpu_custom_call.1} parent=5 // pred_region
        // Predicated region
        $region33: #{tpu_custom_call.1} parent=31 // pred_check
          %p205 = pneg %p38
        $region34: #{tpu_custom_call.1} parent=31 // pred_check_branch
          %207 = sbr.rel (%p205) target = $region36
        $region35: #{tpu_custom_call.1} parent=31 // pred_region
          %s208 = sand.u32 %s28, 1
          %s209 = scalar_lea.sflag [#allocation3], %s208
          %s210 = sand.u32 %s28, 1
          %s211 = smul.addr %s210, 4
          %s212 = scalar_lea.vmem [#allocation2], %s211
          %s214 = ssub.s32 64, 64
          %215 = vsyncadd %s209, %s214
          %s216 = smul.addr %s18, 64
          %s217 = scalar_lea.hbm %s0, %s216
          %s219 = sshll.u32 %s212, 4
          %s220 = int_to_ptr.vmem [resolvable:$true] %s219
          %222 = dma.hbm_to_vmem [thread:$0]  %s217, 64, %s220, %s209
        $region36: #{tpu_custom_call.1} parent=31 // pred_fallthru
          _
      $region32: #{tpu_custom_call.1} parent=5 // pred_fallthru
        _
      %p223 = scmp.le.s32.totalorder 1, %s18
      %p224 = scmp.lt.s32.totalorder %s18, 3
      %p225 = pnand %p223, %p224
      %p226 = pneg %p225
      // Predicated region
      $region37: #{tpu_custom_call.1} parent=5 // pred_check
        _
      $region38: #{tpu_custom_call.1} parent=5 // pred_check_branch
        %228 = sbr.rel (%p225) target = $region40
      $region39: #{tpu_custom_call.1} parent=5 // pred_region
        %s229 = ssub.s32 %s18, 1
        %s230 = sand.u32 %s31, 1
        %s231 = scalar_lea.sflag [#allocation3], %s230
        %s232 = sand.u32 %s31, 1
        %s233 = smul.addr %s232, 4
        %s234 = scalar_lea.vmem [#allocation2], %s233
        // Predicated region
        $region41: #{tpu_custom_call.1} parent=39 // pred_check
          %p235 = pneg %p44
        $region42: #{tpu_custom_call.1} parent=39 // pred_check_branch
          %237 = sbr.rel (%p235) target = $region44
        $region43: #{tpu_custom_call.1} parent=39 // pred_region
          %238 = dma.done %s231, 64
        $region44: #{tpu_custom_call.1} parent=39 // pred_fallthru
          _
        // Predicated region
        $region45: #{tpu_custom_call.1} parent=39 // pred_check
          %p239 = pneg %p65
        $region46: #{tpu_custom_call.1} parent=39 // pred_check_branch
          %241 = sbr.rel (%p239) target = $region48
        $region47: #{tpu_custom_call.1} parent=39 // pred_region
          %242 = dma.done [#allocation6], 3072
        $region48: #{tpu_custom_call.1} parent=39 // pred_fallthru
          _
        // Predicated region
        $region49: #{tpu_custom_call.1} parent=39 // pred_check
          %p243 = pneg %p107
        $region50: #{tpu_custom_call.1} parent=39 // pred_check_branch
          %245 = sbr.rel (%p243) target = $region52
        $region51: #{tpu_custom_call.1} parent=39 // pred_region
          %246 = dma.done [#allocation6], 1024
        $region52: #{tpu_custom_call.1} parent=39 // pred_fallthru
          _
        %s247 = sand.u32 %s31, 1
        %s248 = scalar_lea.sflag [#allocation3], %s247
        %s249 = sand.u32 %s31, 1
        %s250 = smul.addr %s249, 4
        %s251 = scalar_lea.vmem [#allocation2], %s250
        %p252 = pneg %p44
        %p253 = pneg %p41
        %p254 = pneg %p65
        %p255 = pneg %p62
        %p256 = pneg %p86
        %p257 = pneg %p83
        %p258 = pneg %p107
        %p259 = pneg %p104
        %p260 = pneg %p128
        %p261 = pneg %p125
        %p262 = pneg %p154
        %p263 = pneg %p151
        %s264 = sand.u32 %s141, 1
        %s265 = scalar_lea.sflag [#allocation4], %s264
        %s266 = sand.u32 %s141, 1
        %s267 = smul.addr %s266, 8
        %s268 = scalar_lea.vmem [#allocation8], %s267
        %v270 = vld [vmem:[%s234] sm:$0xf]
        %v271 = vld [vmem:[#allocation5] sm:$0xff]
        %v272 = vld [vmem:[#allocation5 + $0x8] sm:$0xf]
        %v273 = vld [vmem:[#allocation5 + $0xc] sm:$0xff]
        %v274 = vld [vmem:[#allocation5 + $0x14] sm:$0xf]
        %v275 = vld [vmem:[#allocation5 + $0x18] sm:$0xff]
        %v276 = vld [vmem:[#allocation5 + $0x20] sm:$0xf]
        %v277 = vld [vmem:[#allocation5 + $0x24] sm:$0xff]
        %v278 = vld [vmem:[#allocation5 + $0x2c] sm:$0xf]
        %v279 = vld [vmem:[#allocation5 + $0x30] sm:$0xff]
        %v280 = vld [vmem:[#allocation5 + $0x38] sm:$0xf]
        %v281 = vld [vmem:[#allocation5 + $0x3c] sm:$0xff]
        %v282 = vld [vmem:[#allocation5 + $0x44] sm:$0xf]
        %v283 = vld [vmem:[#allocation5 + $0x48] sm:$0xff]
        %v284 = vld [vmem:[#allocation5 + $0x50] sm:$0xf]
        %v285 = vld [vmem:[#allocation5 + $0x54] sm:$0xff]
        %v286 = vld [vmem:[#allocation5 + $0x5c] sm:$0xf]
        %v287 = vld [vmem:[#allocation5 + $0x60] sm:$0xff]
        %v288 = vld [vmem:[#allocation5 + $0x68] sm:$0xf]
        %v289 = vld [vmem:[#allocation5 + $0x6c] sm:$0xff]
        %v290 = vld [vmem:[#allocation5 + $0x74] sm:$0xf]
        %v291 = vld [vmem:[#allocation5 + $0x78] sm:$0xff]
        %v292 = vld [vmem:[#allocation5 + $0x80] sm:$0xf]
        %v293 = vld [vmem:[#allocation5 + $0x84] sm:$0xff]
        %v294 = vld [vmem:[#allocation5 + $0x8c] sm:$0xf]
        %v295 = vld [vmem:[#allocation5 + $0x90] sm:$0xff]
        %v296 = vld [vmem:[#allocation5 + $0x98] sm:$0xf]
        %v297 = vld [vmem:[#allocation5 + $0x9c] sm:$0xff]
        %v298 = vld [vmem:[#allocation5 + $0xa4] sm:$0xf]
        %v299 = vld [vmem:[#allocation5 + $0xa8] sm:$0xff]
        %v300 = vld [vmem:[#allocation5 + $0xb0] sm:$0xf]
        %v301 = vld [vmem:[#allocation5 + $0xb4] sm:$0xff]
        %v302 = vld [vmem:[#allocation5 + $0xbc] sm:$0xf]
        %v303 = vld [vmem:[%s2] sm:$0x7]
        %v305 = vlaneseq
        %v306 = vshrl.u32 %v305, 7
        %v307 = vsub.s32 0, %v306
        %v308 = vrot.slane %v303, %v307
        %v309 = vlaneseq
        %v310 = vshrl.u32 %v309, 7
        %v311 = vsub.s32 1, %v310
        %v312 = vrot.slane %v303, %v311
        %v313 = vlaneseq
        %v314 = vshrl.u32 %v313, 7
        %v315 = vsub.s32 2, %v314
        %v316 = vrot.slane %v303, %v315
        %v352 = vunpack.c.l.b16 %v271
        %v353 = vunpack.c.h.b16 %v271
        %v354 = vunpack.c.l.b16 %v272
        %v355 = vunpack.c.l.b16 %v273
        %v356 = vunpack.c.h.b16 %v273
        %v357 = vunpack.c.l.b16 %v274
        %v358 = vunpack.c.l.b16 %v275
        %v359 = vunpack.c.h.b16 %v275
        %v360 = vunpack.c.l.b16 %v276
        %v361 = vunpack.c.l.b16 %v277
        %v362 = vunpack.c.h.b16 %v277
        %v363 = vunpack.c.l.b16 %v278
        %v364 = vunpack.c.l.b16 %v279
        %v365 = vunpack.c.h.b16 %v279
        %v366 = vunpack.c.l.b16 %v280
        %v367 = vunpack.c.l.b16 %v281
        %v368 = vunpack.c.h.b16 %v281
        %v369 = vunpack.c.l.b16 %v282
        %v370 = vunpack.c.l.b16 %v283
        %v371 = vunpack.c.h.b16 %v283
        %v372 = vunpack.c.l.b16 %v284
        %v373 = vunpack.c.l.b16 %v285
        %v374 = vunpack.c.h.b16 %v285
        %v375 = vunpack.c.l.b16 %v286
        %v376 = vunpack.c.l.b16 %v287
        %v377 = vunpack.c.h.b16 %v287
        %v378 = vunpack.c.l.b16 %v288
        %v379 = vunpack.c.l.b16 %v289
        %v380 = vunpack.c.h.b16 %v289
        %v381 = vunpack.c.l.b16 %v290
        %v382 = vunpack.c.l.b16 %v291
        %v383 = vunpack.c.h.b16 %v291
        %v384 = vunpack.c.l.b16 %v292
        %v385 = vunpack.c.l.b16 %v293
        %v386 = vunpack.c.h.b16 %v293
        %v387 = vunpack.c.l.b16 %v294
        %v388 = vunpack.c.l.b16 %v295
        %v389 = vunpack.c.h.b16 %v295
        %v390 = vunpack.c.l.b16 %v296
        %v391 = vunpack.c.l.b16 %v297
        %v392 = vunpack.c.h.b16 %v297
        %v393 = vunpack.c.l.b16 %v298
        %v394 = vunpack.c.l.b16 %v299
        %v395 = vunpack.c.h.b16 %v299
        %v396 = vunpack.c.l.b16 %v300
        %v397 = vunpack.c.l.b16 %v301
        %v398 = vunpack.c.h.b16 %v301
        %v399 = vunpack.c.l.b16 %v302
        %v400 = vpack.c.b16 %v355, %v352
        %v401 = vpack.c.b16 %v356, %v353
        %v402 = vpack.c.b16 %v357, %v354
        %v403 = vpack.c.b16 %v361, %v358
        %v404 = vpack.c.b16 %v362, %v359
        %v405 = vpack.c.b16 %v363, %v360
        %v406 = vpack.c.b16 %v367, %v364
        %v407 = vpack.c.b16 %v368, %v365
        %v408 = vpack.c.b16 %v369, %v366
        %v409 = vpack.c.b16 %v373, %v370
        %v410 = vpack.c.b16 %v374, %v371
        %v411 = vpack.c.b16 %v375, %v372
        %v412 = vpack.c.b16 %v379, %v376
        %v413 = vpack.c.b16 %v380, %v377
        %v414 = vpack.c.b16 %v381, %v378
        %v415 = vpack.c.b16 %v385, %v382
        %v416 = vpack.c.b16 %v386, %v383
        %v417 = vpack.c.b16 %v387, %v384
        %v418 = vpack.c.b16 %v391, %v388
        %v419 = vpack.c.b16 %v392, %v389
        %v420 = vpack.c.b16 %v393, %v390
        %v421 = vpack.c.b16 %v397, %v394
        %v422 = vpack.c.b16 %v398, %v395
        %v423 = vpack.c.b16 %v399, %v396
        %448 = vmatprep.subr.bf16.mxu0 %v401
        %449 = vmatpush1.bf16.msra.mxu0 %v400
        %450 = vmatprep.subr.bf16.mxu0 %v404
        %451 = vmatpush1.bf16.msra.mxu0 %v403
        %452 = vmatprep.subr.bf16.mxu0 %v407
        %453 = vmatpush1.bf16.msra.mxu0 %v406
        %454 = vmatprep.subr.bf16.mxu0 %v410
        %455 = vmatpush1.bf16.msra.mxu0 %v409
        %456 = vmatprep.subr.bf16.mxu0 %v413
        %457 = vmatpush1.bf16.msra.mxu0 %v412
        %458 = vmatprep.subr.bf16.mxu0 %v416
        %459 = vmatpush1.bf16.msra.mxu0 %v415
        %460 = vmatprep.subr.bf16.mxu0 %v419
        %461 = vmatpush1.bf16.msra.mxu0 %v418
        %462 = vmatprep.subr.bf16.mxu0 %v422
        %463 = vmatpush1.bf16.msra.mxu0 %v421
        %464 = vmatprep.subr.bf16.mxu0 0
        %465 = vmatpush1.bf16.msra.mxu0 0
        %466 = vmatprep.subr.bf16.mxu0 0
        %467 = vmatpush1.bf16.msra.mxu0 0
        %468 = vmatprep.subr.bf16.mxu0 0
        %469 = vmatpush1.bf16.msra.mxu0 0
        %470 = vmatprep.subr.bf16.mxu0 0
        %471 = vmatpush1.bf16.msra.mxu0 0
        %472 = vmatprep.subr.bf16.mxu0 0
        %473 = vmatpush1.bf16.msra.mxu0 0
        %474 = vmatprep.subr.bf16.mxu0 0
        %475 = vmatpush1.bf16.msra.mxu0 0
        %476 = vmatprep.subr.bf16.mxu0 0
        %477 = vmatpush1.bf16.msra.mxu0 0
        %478 = vmatprep.subr.bf16.mxu0 0
        %479 = vmatpush1.bf16.msra.mxu0 0
        %480 = vmatprep.mubr.bf16.mxu0 0
        %481 = vmatmul.mubr.bf16.gmra.mrb[0].mxu0 %v270
        %v482 = vpop.f32.mrb[0].mxu0
        %v483 = vadd.f32 %v308, %v482
        %v484 = vpop.f32.mrb[0].mxu0
        %v485 = vadd.f32 %v312, %v484
        %v486 = vpop.f32.mrb[0].mxu0
        %v487 = vpop.f32.mrb[0].mxu0
        %488 = vdwg.mxu0
        %489 = vmatprep.subr.bf16.mxu0 0
        %490 = vmatpush1.bf16.msra.mxu0 %v402
        %491 = vmatprep.subr.bf16.mxu0 0
        %492 = vmatpush1.bf16.msra.mxu0 %v405
        %493 = vmatprep.subr.bf16.mxu0 0
        %494 = vmatpush1.bf16.msra.mxu0 %v408
        %495 = vmatprep.subr.bf16.mxu0 0
        %496 = vmatpush1.bf16.msra.mxu0 %v411
        %497 = vmatprep.subr.bf16.mxu0 0
        %498 = vmatpush1.bf16.msra.mxu0 %v414
        %499 = vmatprep.subr.bf16.mxu0 0
        %500 = vmatpush1.bf16.msra.mxu0 %v417
        %501 = vmatprep.subr.bf16.mxu0 0
        %502 = vmatpush1.bf16.msra.mxu0 %v420
        %503 = vmatprep.subr.bf16.mxu0 0
        %504 = vmatpush1.bf16.msra.mxu0 %v423
        %505 = vmatprep.subr.bf16.mxu0 0
        %506 = vmatpush1.bf16.msra.mxu0 0
        %507 = vmatprep.subr.bf16.mxu0 0
        %508 = vmatpush1.bf16.msra.mxu0 0
        %509 = vmatprep.subr.bf16.mxu0 0
        %510 = vmatpush1.bf16.msra.mxu0 0
        %511 = vmatprep.subr.bf16.mxu0 0
        %512 = vmatpush1.bf16.msra.mxu0 0
        %513 = vmatprep.subr.bf16.mxu0 0
        %514 = vmatpush1.bf16.msra.mxu0 0
        %515 = vmatprep.subr.bf16.mxu0 0
        %516 = vmatpush1.bf16.msra.mxu0 0
        %517 = vmatprep.subr.bf16.mxu0 0
        %518 = vmatpush1.bf16.msra.mxu0 0
        %519 = vmatprep.subr.bf16.mxu0 0
        %520 = vmatpush1.bf16.msra.mxu0 0
        %521 = vmatprep.mubr.bf16.mxu0 0
        %522 = vmatmul.mubr.bf16.gmra.mrb[0].mxu0 %v270
        %v523 = vpop.f32.mrb[0].mxu0
        %v524 = vadd.f32 %v316, %v523
        %v525 = vpop.f32.mrb[0].mxu0
        %v526 = vpop.f32.mrb[0].mxu0
        %v527 = vpop.f32.mrb[0].mxu0
        %528 = vdwg.mxu0
        %v529 = vpack.c.bf16 %v483, %v483
        %v530 = vpack.c.bf16 %v485, %v485
        %v531 = vpack.c.bf16 %v524, %v524
        %v532 = vlaneseq
        %v533 = vand.u32 %v532, 127
        %vm534 = vcmp.ge.s32.totalorder %v533, 0
        %vm535 = vcmp.lt.s32.totalorder %v533, 32
        %vm536 = vmand %vm534, %vm535
        %v537 = vsel %vm536, 1, 0
        %v538 = vcvt.s32.f32 %v537
        %v539 = vpack.c.bf16 %v538, %v538
        %v540 = vmul.bf16 %v530, %v539
        %541 = vmatprep.subr.bf16.mxu0 0
        %542 = vmatpush1.bf16.xpose.msra.mxu0 %v540
        %543 = vmatprep.subr.bf16.mxu0 0
        %544 = vmatpush1.bf16.xpose.msra.mxu0 0
        %545 = vmatprep.subr.bf16.mxu0 0
        %546 = vmatpush1.bf16.xpose.msra.mxu0 0
        %547 = vmatprep.subr.bf16.mxu0 0
        %548 = vmatpush1.bf16.xpose.msra.mxu0 0
        %549 = vmatprep.subr.bf16.mxu0 0
        %550 = vmatpush1.bf16.xpose.msra.mxu0 0
        %551 = vmatprep.subr.bf16.mxu0 0
        %552 = vmatpush1.bf16.xpose.msra.mxu0 0
        %553 = vmatprep.subr.bf16.mxu0 0
        %554 = vmatpush1.bf16.xpose.msra.mxu0 0
        %555 = vmatprep.subr.bf16.mxu0 0
        %556 = vmatpush1.bf16.xpose.msra.mxu0 0
        %557 = vmatprep.subr.bf16.mxu0 0
        %558 = vmatpush1.bf16.xpose.msra.mxu0 0
        %559 = vmatprep.subr.bf16.mxu0 0
        %560 = vmatpush1.bf16.xpose.msra.mxu0 0
        %561 = vmatprep.subr.bf16.mxu0 0
        %562 = vmatpush1.bf16.xpose.msra.mxu0 0
        %563 = vmatprep.subr.bf16.mxu0 0
        %564 = vmatpush1.bf16.xpose.msra.mxu0 0
        %565 = vmatprep.subr.bf16.mxu0 0
        %566 = vmatpush1.bf16.xpose.msra.mxu0 0
        %567 = vmatprep.subr.bf16.mxu0 0
        %568 = vmatpush1.bf16.xpose.msra.mxu0 0
        %569 = vmatprep.subr.bf16.mxu0 0
        %570 = vmatpush1.bf16.xpose.msra.mxu0 0
        %571 = vmatprep.subr.bf16.mxu0 0
        %572 = vmatpush1.bf16.xpose.msra.mxu0 0
        %573 = vmatprep.mubr.bf16.mxu0 0
        %574 = vmatmul.mubr.bf16.gmra.mrb[0].mxu0 %v529
        %v575 = vpop.f32.mrb[0].mxu0
        %v576 = vadd.f32 0.0, %v575
        %v577 = vpop.f32.mrb[0].mxu0
        %v578 = vpop.f32.mrb[0].mxu0
        %v579 = vpop.f32.mrb[0].mxu0
        %580 = vdwg.mxu0
        %vm581 = vcmask 64512
        %v582 = vsel %vm581, %v576, -inf
        %583 = vmax.xlane.f32.xlu0 %v582
        %v584 = vpop.xlane.xlu0 %583
        %v585 = vsub.f32 %v576, %v584
        %v586 = vmul.f32 %v585, 1.442695
        %v587 = vpow.pop %v586
        %v588 = vsel %vm581, %v587, 0.0
        %589 = vadd.xlane.f32.xlu0 %v588
        %v590 = vpop.xlane.xlu0 %589
        %v591 = vpack.c.bf16 %v587, %v587
        %v592 = vmul.bf16 %v531, %v539
        %v594 = vsel %vm581, %v591, 0
        %vm596 = vcmask 1043456
        %v598 = vsel %vm596, %v592, 0
        %600 = vmatprep.subr.bf16.mxu0 0
        %601 = vmatpush1.bf16.msra.mxu0 %v598
        %602 = vmatprep.subr.bf16.mxu0 0
        %603 = vmatpush1.bf16.msra.mxu0 0
        %604 = vmatprep.subr.bf16.mxu0 0
        %605 = vmatpush1.bf16.msra.mxu0 0
        %606 = vmatprep.subr.bf16.mxu0 0
        %607 = vmatpush1.bf16.msra.mxu0 0
        %608 = vmatprep.subr.bf16.mxu0 0
        %609 = vmatpush1.bf16.msra.mxu0 0
        %610 = vmatprep.subr.bf16.mxu0 0
        %611 = vmatpush1.bf16.msra.mxu0 0
        %612 = vmatprep.subr.bf16.mxu0 0
        %613 = vmatpush1.bf16.msra.mxu0 0
        %614 = vmatprep.subr.bf16.mxu0 0
        %615 = vmatpush1.bf16.msra.mxu0 0
        %616 = vmatprep.subr.bf16.mxu0 0
        %617 = vmatpush1.bf16.msra.mxu0 0
        %618 = vmatprep.subr.bf16.mxu0 0
        %619 = vmatpush1.bf16.msra.mxu0 0
        %620 = vmatprep.subr.bf16.mxu0 0
        %621 = vmatpush1.bf16.msra.mxu0 0
        %622 = vmatprep.subr.bf16.mxu0 0
        %623 = vmatpush1.bf16.msra.mxu0 0
        %624 = vmatprep.subr.bf16.mxu0 0
        %625 = vmatpush1.bf16.msra.mxu0 0
        %626 = vmatprep.subr.bf16.mxu0 0
        %627 = vmatpush1.bf16.msra.mxu0 0
        %628 = vmatprep.subr.bf16.mxu0 0
        %629 = vmatpush1.bf16.msra.mxu0 0
        %630 = vmatprep.subr.bf16.mxu0 0
        %631 = vmatpush1.bf16.msra.mxu0 0
        %632 = vmatprep.mubr.bf16.mxu0 0
        %633 = vmatmul.mubr.bf16.gmra.mrb[0].mxu0 %v594
        %v634 = vpop.f32.mrb[0].mxu0
        %v635 = vadd.f32 0.0, %v634
        %v636 = vpop.f32.mrb[0].mxu0
        %v637 = vpop.f32.mrb[0].mxu0
        %v638 = vpop.f32.mrb[0].mxu0
        %639 = vdwg.mxu0
        %v640 = vrcp.pop %v590
        %v641 = vmul.f32 %v635, %v640
        %vm642 = vcmp.ge.s32.totalorder %v533, 32
        %vm643 = vcmp.lt.s32.totalorder %v533, 64
        %vm644 = vmand %vm642, %vm643
        %v645 = vsel %vm644, 1, 0
        %v646 = vcvt.s32.f32 %v645
        %v647 = vpack.c.bf16 %v646, %v646
        %v648 = vmul.bf16 %v530, %v647
        %649 = vmatprep.subr.bf16.mxu0 0
        %650 = vmatpush1.bf16.xpose.msra.mxu0 %v648
        %651 = vmatprep.subr.bf16.mxu0 0
        %652 = vmatpush1.bf16.xpose.msra.mxu0 0
        %653 = vmatprep.subr.bf16.mxu0 0
        %654 = vmatpush1.bf16.xpose.msra.mxu0 0
        %655 = vmatprep.subr.bf16.mxu0 0
        %656 = vmatpush1.bf16.xpose.msra.mxu0 0
        %657 = vmatprep.subr.bf16.mxu0 0
        %658 = vmatpush1.bf16.xpose.msra.mxu0 0
        %659 = vmatprep.subr.bf16.mxu0 0
        %660 = vmatpush1.bf16.xpose.msra.mxu0 0
        %661 = vmatprep.subr.bf16.mxu0 0
        %662 = vmatpush1.bf16.xpose.msra.mxu0 0
        %663 = vmatprep.subr.bf16.mxu0 0
        %664 = vmatpush1.bf16.xpose.msra.mxu0 0
        %665 = vmatprep.subr.bf16.mxu0 0
        %666 = vmatpush1.bf16.xpose.msra.mxu0 0
        %667 = vmatprep.subr.bf16.mxu0 0
        %668 = vmatpush1.bf16.xpose.msra.mxu0 0
        %669 = vmatprep.subr.bf16.mxu0 0
        %670 = vmatpush1.bf16.xpose.msra.mxu0 0
        %671 = vmatprep.subr.bf16.mxu0 0
        %672 = vmatpush1.bf16.xpose.msra.mxu0 0
        %673 = vmatprep.subr.bf16.mxu0 0
        %674 = vmatpush1.bf16.xpose.msra.mxu0 0
        %675 = vmatprep.subr.bf16.mxu0 0
        %676 = vmatpush1.bf16.xpose.msra.mxu0 0
        %677 = vmatprep.subr.bf16.mxu0 0
        %678 = vmatpush1.bf16.xpose.msra.mxu0 0
        %679 = vmatprep.subr.bf16.mxu0 0
        %680 = vmatpush1.bf16.xpose.msra.mxu0 0
        %681 = vmatprep.mubr.bf16.mxu0 0
        %682 = vmatmul.mubr.bf16.gmra.mrb[0].mxu0 %v529
        %v683 = vpop.f32.mrb[0].mxu0
        %v684 = vadd.f32 0.0, %v683
        %v685 = vpop.f32.mrb[0].mxu0
        %v686 = vpop.f32.mrb[0].mxu0
        %v687 = vpop.f32.mrb[0].mxu0
        %688 = vdwg.mxu0
        %v689 = vsel %vm581, %v684, -inf
        %690 = vmax.xlane.f32.xlu0 %v689
        %v691 = vpop.xlane.xlu0 %690
        %v692 = vsub.f32 %v684, %v691
        %v693 = vmul.f32 %v692, 1.442695
        %v694 = vpow.pop %v693
        %v695 = vsel %vm581, %v694, 0.0
        %696 = vadd.xlane.f32.xlu0 %v695
        %v697 = vpop.xlane.xlu0 %696
        %v698 = vpack.c.bf16 %v694, %v694
        %v699 = vmul.bf16 %v531, %v647
        %v701 = vsel %vm581, %v698, 0
        %v704 = vsel %vm596, %v699, 0
        %706 = vmatprep.subr.bf16.mxu0 0
        %707 = vmatpush1.bf16.msra.mxu0 %v704
        %708 = vmatprep.subr.bf16.mxu0 0
        %709 = vmatpush1.bf16.msra.mxu0 0
        %710 = vmatprep.subr.bf16.mxu0 0
        %711 = vmatpush1.bf16.msra.mxu0 0
        %712 = vmatprep.subr.bf16.mxu0 0
        %713 = vmatpush1.bf16.msra.mxu0 0
        %714 = vmatprep.subr.bf16.mxu0 0
        %715 = vmatpush1.bf16.msra.mxu0 0
        %716 = vmatprep.subr.bf16.mxu0 0
        %717 = vmatpush1.bf16.msra.mxu0 0
        %718 = vmatprep.subr.bf16.mxu0 0
        %719 = vmatpush1.bf16.msra.mxu0 0
        %720 = vmatprep.subr.bf16.mxu0 0
        %721 = vmatpush1.bf16.msra.mxu0 0
        %722 = vmatprep.subr.bf16.mxu0 0
        %723 = vmatpush1.bf16.msra.mxu0 0
        %724 = vmatprep.subr.bf16.mxu0 0
        %725 = vmatpush1.bf16.msra.mxu0 0
        %726 = vmatprep.subr.bf16.mxu0 0
        %727 = vmatpush1.bf16.msra.mxu0 0
        %728 = vmatprep.subr.bf16.mxu0 0
        %729 = vmatpush1.bf16.msra.mxu0 0
        %730 = vmatprep.subr.bf16.mxu0 0
        %731 = vmatpush1.bf16.msra.mxu0 0
        %732 = vmatprep.subr.bf16.mxu0 0
        %733 = vmatpush1.bf16.msra.mxu0 0
        %734 = vmatprep.subr.bf16.mxu0 0
        %735 = vmatpush1.bf16.msra.mxu0 0
        %736 = vmatprep.subr.bf16.mxu0 0
        %737 = vmatpush1.bf16.msra.mxu0 0
        %738 = vmatprep.mubr.bf16.mxu0 0
        %739 = vmatmul.mubr.bf16.gmra.mrb[0].mxu0 %v701
        %v740 = vpop.f32.mrb[0].mxu0
        %v741 = vadd.f32 0.0, %v740
        %v742 = vpop.f32.mrb[0].mxu0
        %v743 = vpop.f32.mrb[0].mxu0
        %v744 = vpop.f32.mrb[0].mxu0
        %745 = vdwg.mxu0
        %v746 = vrcp.pop %v697
        %v747 = vmul.f32 %v741, %v746
        %v748 = vadd.f32 %v641, %v747
        %vm749 = vcmp.ge.s32.totalorder %v533, 64
        %vm750 = vcmp.lt.s32.totalorder %v533, 96
        %vm751 = vmand %vm749, %vm750
        %v752 = vsel %vm751, 1, 0
        %v753 = vcvt.s32.f32 %v752
        %v754 = vpack.c.bf16 %v753, %v753
        %v755 = vmul.bf16 %v530, %v754
        %756 = vmatprep.subr.bf16.mxu0 0
        %757 = vmatpush1.bf16.xpose.msra.mxu0 %v755
        %758 = vmatprep.subr.bf16.mxu0 0
        %759 = vmatpush1.bf16.xpose.msra.mxu0 0
        %760 = vmatprep.subr.bf16.mxu0 0
        %761 = vmatpush1.bf16.xpose.msra.mxu0 0
        %762 = vmatprep.subr.bf16.mxu0 0
        %763 = vmatpush1.bf16.xpose.msra.mxu0 0
        %764 = vmatprep.subr.bf16.mxu0 0
        %765 = vmatpush1.bf16.xpose.msra.mxu0 0
        %766 = vmatprep.subr.bf16.mxu0 0
        %767 = vmatpush1.bf16.xpose.msra.mxu0 0
        %768 = vmatprep.subr.bf16.mxu0 0
        %769 = vmatpush1.bf16.xpose.msra.mxu0 0
        %770 = vmatprep.subr.bf16.mxu0 0
        %771 = vmatpush1.bf16.xpose.msra.mxu0 0
        %772 = vmatprep.subr.bf16.mxu0 0
        %773 = vmatpush1.bf16.xpose.msra.mxu0 0
        %774 = vmatprep.subr.bf16.mxu0 0
        %775 = vmatpush1.bf16.xpose.msra.mxu0 0
        %776 = vmatprep.subr.bf16.mxu0 0
        %777 = vmatpush1.bf16.xpose.msra.mxu0 0
        %778 = vmatprep.subr.bf16.mxu0 0
        %779 = vmatpush1.bf16.xpose.msra.mxu0 0
        %780 = vmatprep.subr.bf16.mxu0 0
        %781 = vmatpush1.bf16.xpose.msra.mxu0 0
        %782 = vmatprep.subr.bf16.mxu0 0
        %783 = vmatpush1.bf16.xpose.msra.mxu0 0
        %784 = vmatprep.subr.bf16.mxu0 0
        %785 = vmatpush1.bf16.xpose.msra.mxu0 0
        %786 = vmatprep.subr.bf16.mxu0 0
        %787 = vmatpush1.bf16.xpose.msra.mxu0 0
        %788 = vmatprep.mubr.bf16.mxu0 0
        %789 = vmatmul.mubr.bf16.gmra.mrb[0].mxu0 %v529
        %v790 = vpop.f32.mrb[0].mxu0
        %v791 = vadd.f32 0.0, %v790
        %v792 = vpop.f32.mrb[0].mxu0
        %v793 = vpop.f32.mrb[0].mxu0
        %v794 = vpop.f32.mrb[0].mxu0
        %795 = vdwg.mxu0
        %v796 = vsel %vm581, %v791, -inf
        %797 = vmax.xlane.f32.xlu0 %v796
        %v798 = vpop.xlane.xlu0 %797
        %v799 = vsub.f32 %v791, %v798
        %v800 = vmul.f32 %v799, 1.442695
        %v801 = vpow.pop %v800
        %v802 = vsel %vm581, %v801, 0.0
        %803 = vadd.xlane.f32.xlu0 %v802
        %v804 = vpop.xlane.xlu0 %803
        %v805 = vpack.c.bf16 %v801, %v801
        %v806 = vmul.bf16 %v531, %v754
        %v808 = vsel %vm581, %v805, 0
        %v811 = vsel %vm596, %v806, 0
        %813 = vmatprep.subr.bf16.mxu0 0
        %814 = vmatpush1.bf16.msra.mxu0 %v811
        %815 = vmatprep.subr.bf16.mxu0 0
        %816 = vmatpush1.bf16.msra.mxu0 0
        %817 = vmatprep.subr.bf16.mxu0 0
        %818 = vmatpush1.bf16.msra.mxu0 0
        %819 = vmatprep.subr.bf16.mxu0 0
        %820 = vmatpush1.bf16.msra.mxu0 0
        %821 = vmatprep.subr.bf16.mxu0 0
        %822 = vmatpush1.bf16.msra.mxu0 0
        %823 = vmatprep.subr.bf16.mxu0 0
        %824 = vmatpush1.bf16.msra.mxu0 0
        %825 = vmatprep.subr.bf16.mxu0 0
        %826 = vmatpush1.bf16.msra.mxu0 0
        %827 = vmatprep.subr.bf16.mxu0 0
        %828 = vmatpush1.bf16.msra.mxu0 0
        %829 = vmatprep.subr.bf16.mxu0 0
        %830 = vmatpush1.bf16.msra.mxu0 0
        %831 = vmatprep.subr.bf16.mxu0 0
        %832 = vmatpush1.bf16.msra.mxu0 0
        %833 = vmatprep.subr.bf16.mxu0 0
        %834 = vmatpush1.bf16.msra.mxu0 0
        %835 = vmatprep.subr.bf16.mxu0 0
        %836 = vmatpush1.bf16.msra.mxu0 0
        %837 = vmatprep.subr.bf16.mxu0 0
        %838 = vmatpush1.bf16.msra.mxu0 0
        %839 = vmatprep.subr.bf16.mxu0 0
        %840 = vmatpush1.bf16.msra.mxu0 0
        %841 = vmatprep.subr.bf16.mxu0 0
        %842 = vmatpush1.bf16.msra.mxu0 0
        %843 = vmatprep.subr.bf16.mxu0 0
        %844 = vmatpush1.bf16.msra.mxu0 0
        %845 = vmatprep.mubr.bf16.mxu0 0
        %846 = vmatmul.mubr.bf16.gmra.mrb[0].mxu0 %v808
        %v847 = vpop.f32.mrb[0].mxu0
        %v848 = vadd.f32 0.0, %v847
        %v849 = vpop.f32.mrb[0].mxu0
        %v850 = vpop.f32.mrb[0].mxu0
        %v851 = vpop.f32.mrb[0].mxu0
        %852 = vdwg.mxu0
        %v853 = vrcp.pop %v804
        %v854 = vmul.f32 %v848, %v853
        %v855 = vadd.f32 %v748, %v854
        %vm856 = vcmp.ge.s32.totalorder %v533, 96
        %vm857 = vcmp.lt.s32.totalorder %v533, 128
        %vm858 = vmand %vm856, %vm857
        %v859 = vsel %vm858, 1, 0
        %v860 = vcvt.s32.f32 %v859
        %v861 = vpack.c.bf16 %v860, %v860
        %v862 = vmul.bf16 %v530, %v861
        %863 = vmatprep.subr.bf16.mxu0 0
        %864 = vmatpush1.bf16.xpose.msra.mxu0 %v862
        %865 = vmatprep.subr.bf16.mxu0 0
        %866 = vmatpush1.bf16.xpose.msra.mxu0 0
        %867 = vmatprep.subr.bf16.mxu0 0
        %868 = vmatpush1.bf16.xpose.msra.mxu0 0
        %869 = vmatprep.subr.bf16.mxu0 0
        %870 = vmatpush1.bf16.xpose.msra.mxu0 0
        %871 = vmatprep.subr.bf16.mxu0 0
        %872 = vmatpush1.bf16.xpose.msra.mxu0 0
        %873 = vmatprep.subr.bf16.mxu0 0
        %874 = vmatpush1.bf16.xpose.msra.mxu0 0
        %875 = vmatprep.subr.bf16.mxu0 0
        %876 = vmatpush1.bf16.xpose.msra.mxu0 0
        %877 = vmatprep.subr.bf16.mxu0 0
        %878 = vmatpush1.bf16.xpose.msra.mxu0 0
        %879 = vmatprep.subr.bf16.mxu0 0
        %880 = vmatpush1.bf16.xpose.msra.mxu0 0
        %881 = vmatprep.subr.bf16.mxu0 0
        %882 = vmatpush1.bf16.xpose.msra.mxu0 0
        %883 = vmatprep.subr.bf16.mxu0 0
        %884 = vmatpush1.bf16.xpose.msra.mxu0 0
        %885 = vmatprep.subr.bf16.mxu0 0
        %886 = vmatpush1.bf16.xpose.msra.mxu0 0
        %887 = vmatprep.subr.bf16.mxu0 0
        %888 = vmatpush1.bf16.xpose.msra.mxu0 0
        %889 = vmatprep.subr.bf16.mxu0 0
        %890 = vmatpush1.bf16.xpose.msra.mxu0 0
        %891 = vmatprep.subr.bf16.mxu0 0
        %892 = vmatpush1.bf16.xpose.msra.mxu0 0
        %893 = vmatprep.subr.bf16.mxu0 0
        %894 = vmatpush1.bf16.xpose.msra.mxu0 0
        %895 = vmatprep.mubr.bf16.mxu0 0
        %896 = vmatmul.mubr.bf16.gmra.mrb[0].mxu0 %v529
        %v897 = vpop.f32.mrb[0].mxu0
        %v898 = vadd.f32 0.0, %v897
        %v899 = vpop.f32.mrb[0].mxu0
        %v900 = vpop.f32.mrb[0].mxu0
        %v901 = vpop.f32.mrb[0].mxu0
        %902 = vdwg.mxu0
        %v903 = vsel %vm581, %v898, -inf
        %904 = vmax.xlane.f32.xlu0 %v903
        %v905 = vpop.xlane.xlu0 %904
        %v906 = vsub.f32 %v898, %v905
        %v907 = vmul.f32 %v906, 1.442695
        %v908 = vpow.pop %v907
        %v909 = vsel %vm581, %v908, 0.0
        %910 = vadd.xlane.f32.xlu0 %v909
        %v911 = vpop.xlane.xlu0 %910
        %v912 = vpack.c.bf16 %v908, %v908
        %v913 = vmul.bf16 %v531, %v861
        %v915 = vsel %vm581, %v912, 0
        %v918 = vsel %vm596, %v913, 0
        %920 = vmatprep.subr.bf16.mxu0 0
        %921 = vmatpush1.bf16.msra.mxu0 %v918
        %922 = vmatprep.subr.bf16.mxu0 0
        %923 = vmatpush1.bf16.msra.mxu0 0
        %924 = vmatprep.subr.bf16.mxu0 0
        %925 = vmatpush1.bf16.msra.mxu0 0
        %926 = vmatprep.subr.bf16.mxu0 0
        %927 = vmatpush1.bf16.msra.mxu0 0
        %928 = vmatprep.subr.bf16.mxu0 0
        %929 = vmatpush1.bf16.msra.mxu0 0
        %930 = vmatprep.subr.bf16.mxu0 0
        %931 = vmatpush1.bf16.msra.mxu0 0
        %932 = vmatprep.subr.bf16.mxu0 0
        %933 = vmatpush1.bf16.msra.mxu0 0
        %934 = vmatprep.subr.bf16.mxu0 0
        %935 = vmatpush1.bf16.msra.mxu0 0
        %936 = vmatprep.subr.bf16.mxu0 0
        %937 = vmatpush1.bf16.msra.mxu0 0
        %938 = vmatprep.subr.bf16.mxu0 0
        %939 = vmatpush1.bf16.msra.mxu0 0
        %940 = vmatprep.subr.bf16.mxu0 0
        %941 = vmatpush1.bf16.msra.mxu0 0
        %942 = vmatprep.subr.bf16.mxu0 0
        %943 = vmatpush1.bf16.msra.mxu0 0
        %944 = vmatprep.subr.bf16.mxu0 0
        %945 = vmatpush1.bf16.msra.mxu0 0
        %946 = vmatprep.subr.bf16.mxu0 0
        %947 = vmatpush1.bf16.msra.mxu0 0
        %948 = vmatprep.subr.bf16.mxu0 0
        %949 = vmatpush1.bf16.msra.mxu0 0
        %950 = vmatprep.subr.bf16.mxu0 0
        %951 = vmatpush1.bf16.msra.mxu0 0
        %952 = vmatprep.mubr.bf16.mxu0 0
        %953 = vmatmul.mubr.bf16.gmra.mrb[0].mxu0 %v915
        %v954 = vpop.f32.mrb[0].mxu0
        %v955 = vadd.f32 0.0, %v954
        %v956 = vpop.f32.mrb[0].mxu0
        %v957 = vpop.f32.mrb[0].mxu0
        %v958 = vpop.f32.mrb[0].mxu0
        %959 = vdwg.mxu0
        %v960 = vrcp.pop %v911
        %v961 = vmul.f32 %v955, %v960
        %v962 = vadd.f32 %v855, %v961
        %v963 = vpack.c.bf16 %v962, %v962
        %v964 = vld [vmem:[#allocation7] sm:$0xf]
        %v965 = vld [vmem:[#allocation7 + $0x4] sm:$0xf]
        %v966 = vld [vmem:[#allocation7 + $0x8] sm:$0xf]
        %v967 = vld [vmem:[#allocation7 + $0xc] sm:$0xf]
        %v968 = vld [vmem:[#allocation7 + $0x10] sm:$0xf]
        %v969 = vld [vmem:[#allocation7 + $0x14] sm:$0xf]
        %v970 = vld [vmem:[#allocation7 + $0x18] sm:$0xf]
        %v971 = vld [vmem:[#allocation7 + $0x1c] sm:$0xf]
        %v972 = vld [vmem:[#allocation7 + $0x20] sm:$0xf]
        %v973 = vld [vmem:[#allocation7 + $0x24] sm:$0xf]
        %v974 = vld [vmem:[#allocation7 + $0x28] sm:$0xf]
        %v975 = vld [vmem:[#allocation7 + $0x2c] sm:$0xf]
        %v976 = vld [vmem:[#allocation7 + $0x30] sm:$0xf]
        %v977 = vld [vmem:[#allocation7 + $0x34] sm:$0xf]
        %v978 = vld [vmem:[#allocation7 + $0x38] sm:$0xf]
        %v979 = vld [vmem:[#allocation7 + $0x3c] sm:$0xf]
        %v980 = vld [vmem:[%s4] sm:$0x1]
        %v982 = vlaneseq
        %v983 = vshrl.u32 %v982, 7
        %v984 = vsub.s32 0, %v983
        %v985 = vrot.slane %v980, %v984
        %v1003 = vunpack.c.l.b16 %v964
        %v1004 = vunpack.c.l.b16 %v965
        %v1005 = vunpack.c.l.b16 %v966
        %v1006 = vunpack.c.l.b16 %v967
        %v1007 = vunpack.c.l.b16 %v968
        %v1008 = vunpack.c.l.b16 %v969
        %v1009 = vunpack.c.l.b16 %v970
        %v1010 = vunpack.c.l.b16 %v971
        %v1011 = vunpack.c.l.b16 %v972
        %v1012 = vunpack.c.l.b16 %v973
        %v1013 = vunpack.c.l.b16 %v974
        %v1014 = vunpack.c.l.b16 %v975
        %v1015 = vunpack.c.l.b16 %v976
        %v1016 = vunpack.c.l.b16 %v977
        %v1017 = vunpack.c.l.b16 %v978
        %v1018 = vunpack.c.l.b16 %v979
        %v1019 = vpack.c.b16 %v1004, %v1003
        %v1020 = vpack.c.b16 %v1006, %v1005
        %v1021 = vpack.c.b16 %v1008, %v1007
        %v1022 = vpack.c.b16 %v1010, %v1009
        %v1023 = vpack.c.b16 %v1012, %v1011
        %v1024 = vpack.c.b16 %v1014, %v1013
        %v1025 = vpack.c.b16 %v1016, %v1015
        %v1026 = vpack.c.b16 %v1018, %v1017
        %1035 = vmatprep.subr.bf16.mxu0 0
        %1036 = vmatpush1.bf16.msra.mxu0 %v1019
        %1037 = vmatprep.subr.bf16.mxu0 0
        %1038 = vmatpush1.bf16.msra.mxu0 %v1020
        %1039 = vmatprep.subr.bf16.mxu0 0
        %1040 = vmatpush1.bf16.msra.mxu0 %v1021
        %1041 = vmatprep.subr.bf16.mxu0 0
        %1042 = vmatpush1.bf16.msra.mxu0 %v1022
        %1043 = vmatprep.subr.bf16.mxu0 0
        %1044 = vmatpush1.bf16.msra.mxu0 %v1023
        %1045 = vmatprep.subr.bf16.mxu0 0
        %1046 = vmatpush1.bf16.msra.mxu0 %v1024
        %1047 = vmatprep.subr.bf16.mxu0 0
        %1048 = vmatpush1.bf16.msra.mxu0 %v1025
        %1049 = vmatprep.subr.bf16.mxu0 0
        %1050 = vmatpush1.bf16.msra.mxu0 %v1026
        %1051 = vmatprep.subr.bf16.mxu0 0
        %1052 = vmatpush1.bf16.msra.mxu0 0
        %1053 = vmatprep.subr.bf16.mxu0 0
        %1054 = vmatpush1.bf16.msra.mxu0 0
        %1055 = vmatprep.subr.bf16.mxu0 0
        %1056 = vmatpush1.bf16.msra.mxu0 0
        %1057 = vmatprep.subr.bf16.mxu0 0
        %1058 = vmatpush1.bf16.msra.mxu0 0
        %1059 = vmatprep.subr.bf16.mxu0 0
        %1060 = vmatpush1.bf16.msra.mxu0 0
        %1061 = vmatprep.subr.bf16.mxu0 0
        %1062 = vmatpush1.bf16.msra.mxu0 0
        %1063 = vmatprep.subr.bf16.mxu0 0
        %1064 = vmatpush1.bf16.msra.mxu0 0
        %1065 = vmatprep.subr.bf16.mxu0 0
        %1066 = vmatpush1.bf16.msra.mxu0 0
        %1067 = vmatprep.mubr.bf16.mxu0 0
        %1068 = vmatmul.mubr.bf16.gmra.mrb[0].mxu0 %v963
        %v1069 = vpop.f32.mrb[0].mxu0
        %v1070 = vadd.f32 %v985, %v1069
        %v1071 = vpop.f32.mrb[0].mxu0
        %v1072 = vpop.f32.mrb[0].mxu0
        %v1073 = vpop.f32.mrb[0].mxu0
        %1074 = vdwg.mxu0
        %1075 = vst [vmem:[%s268] sm:$0xff] %v1070
        %s1076 = sand.u32 %s141, 1
        %s1077 = scalar_lea.sflag [#allocation4], %s1076
        %s1078 = sand.u32 %s141, 1
        %s1079 = smul.addr %s1078, 8
        %s1080 = scalar_lea.vmem [#allocation8], %s1079
        // Predicated region
        $region53: #{tpu_custom_call.1} parent=39 // pred_check
          %p1081 = pneg %p151
        $region54: #{tpu_custom_call.1} parent=39 // pred_check_branch
          %1083 = sbr.rel (%p1081) target = $region56
        $region55: #{tpu_custom_call.1} parent=39 // pred_region
          %s1085 = ssub.s32 128, 128
          %1086 = vsyncadd %s1077, %s1085
          %s1087 = smul.addr %s23, 128
          %s1088 = scalar_lea.hbm %s5, %s1087
          %s1090 = sshll.u32 %s1080, 4
          %s1091 = int_to_ptr.vmem [resolvable:$true] %s1090
          %1093 = dma.vmem_to_hbm [thread:$0]  %s1091, 128, %s1088, %s1077
        $region56: #{tpu_custom_call.1} parent=39 // pred_fallthru
          _
      $region40: #{tpu_custom_call.1} parent=5 // pred_fallthru
        _
      %p1094 = scmp.le.s32.totalorder 2, %s18
      // Predicated region
      $region57: #{tpu_custom_call.1} parent=5 // pred_check
        %p1095 = pneg %p1094
      $region58: #{tpu_custom_call.1} parent=5 // pred_check_branch
        %1097 = sbr.rel (%p1095) target = $region60
      $region59: #{tpu_custom_call.1} parent=5 // pred_region
        %s1098 = ssub.s32 %s18, 2
        // Predicated region
        $region61: #{tpu_custom_call.1} parent=59 // pred_check
          %p1099 = pneg %p157
        $region62: #{tpu_custom_call.1} parent=59 // pred_check_branch
          %1101 = sbr.rel (%p1099) target = $region64
        $region63: #{tpu_custom_call.1} parent=59 // pred_region
          %s1102 = sand.u32 %s142, 1
          %s1103 = scalar_lea.sflag [#allocation4], %s1102
          %s1104 = sand.u32 %s142, 1
          %s1105 = smul.addr %s1104, 8
          %s1106 = scalar_lea.vmem [#allocation8], %s1105
          %1107 = dma.done %s1103, 128
        $region64: #{tpu_custom_call.1} parent=59 // pred_fallthru
          _
      $region60: #{tpu_custom_call.1} parent=5 // pred_fallthru
        _
    $region6: #{tpu_custom_call.1} parent=1 // loop_footer
      %s22 = sadd.s32 1, %s18
    $region7: #{tpu_custom_call.1} parent=1 // loop_footer_branch
      %17 = sbr.rel target = $region3
    $region8: #{tpu_custom_call.1} parent=1 // loop_exit
      _
    %1108 = vsyncpa [#allocation3], 1
    %s1109 = scalar_lea.sflag [#allocation3], 1
    %1110 = vsyncpa %s1109, 1
    %1111 = vsyncpa [#allocation6], 1
    %1112 = vsyncpa [#allocation4], 1
    %s1113 = scalar_lea.sflag [#allocation4], 1
    %1114 = vsyncpa %s1113, 1

</llo_original>
